<compile_context>
chip_gen: v6e
topology: v6e:2x2x1
jax: 0.10.0
libtpu: 0.0.40
codegen_flags: <defaults>
</compile_context>

<pallas_src>
import jax
import jax.numpy as jnp
from jax.experimental import pallas as pl
from jax.experimental.pallas import tpu as pltpu


# ----------------------------------------------------------------------------
# Kernel
# ----------------------------------------------------------------------------
def rl3df_gate_kernel(
    x_ref,            # (C_IN, TM)   f32 token tile, tokens on the lane axis
    w3_ref, b3_ref,   # (HID, C_IN) f32 (both affines folded in), (HID, 1) f32
    w4_ref, b4_ref,   # (HID, HID)  bf16, (HID, 1) f32     backbone_3d
    w5_ref, b5_ref,   # (HID, HID)  bf16, (HID, 1) f32     head (gate branch)
    w6_ref, b6_ref,   # (C_OUT, HID) bf16, (C_OUT, 1) f32  roi_head
    o_ref,            # (C_OUT, TM)
):
    x = x_ref[...]                                            # (C_IN, TM) f32

    # --- pre_processor + pre_processor2 + img_cls (fused, folded into w3/b3) ---
    # K = C_IN is tiny, but HID=32 leaves the MXU / vector-extended slot with
    # plenty of slack, so contract there (f32) instead of burning VALU slots.
    h = jnp.dot(w3_ref[...], x, preferred_element_type=jnp.float32) + b3_ref[...]
    h = jnp.maximum(h, 0.0)                                   # img_cls ReLU

    # --- backbone_3d: 1x1 conv (channel matmul, bf16 operands / f32 acc) + ReLU ---
    h2 = jnp.dot(w4_ref[...], h.astype(jnp.bfloat16),
                 preferred_element_type=jnp.float32) + b4_ref[...]
    h2 = jnp.maximum(h2, 0.0)

    # --- head: sigmoid gate via a single EUP tanh push (exact, no approx recip) ---
    gl = jnp.dot(w5_ref[...], h2.astype(jnp.bfloat16),
                 preferred_element_type=jnp.float32) + b5_ref[...]
    gate = 0.5 * (jnp.tanh(0.5 * gl) + 1.0)
    hg = h2 * gate

    # --- roi_head: final linear projection; lane-dense (C_OUT, TM) store ---
    out = jnp.dot(w6_ref[...], hg.astype(jnp.bfloat16),
                  preferred_element_type=jnp.float32) + b6_ref[...]
    o_ref[...] = out.astype(o_ref.dtype)


# ----------------------------------------------------------------------------
# Wrapper
# ----------------------------------------------------------------------------
def fold_params(params):
    """Fold the two per-channel affines into the img_cls weights and transpose
    everything to the channels-first kernel orientation; bf16 for the MXU-heavy
    square weights, f32 for the tiny-K stage-1 weight and all biases."""
    (g1, b1, g2, b2, w3, b3, w4, b4, w5, b5, w6, b6) = params
    g = (g1 * g2).reshape(-1)                         # (C_IN,)
    b = (b1 * g2 + b2).reshape(-1)                    # (C_IN,)
    w3f = w3 * g[:, None]                             # (C_IN, HID), rows scaled
    b3f = b @ w3 + b3.reshape(-1)                     # (HID,)

    w3t = jnp.asarray(w3f.T, jnp.float32)             # (HID, C_IN)  f32
    b3t = b3f.reshape(-1, 1).astype(jnp.float32)      # (HID, 1)
    w4t = w4.T.astype(jnp.bfloat16)                   # (HID, HID)
    b4t = b4.reshape(-1, 1).astype(jnp.float32)
    w5t = w5.T.astype(jnp.bfloat16)                   # (HID, HID)
    b5t = b5.reshape(-1, 1).astype(jnp.float32)
    w6t = w6.T.astype(jnp.bfloat16)                   # (C_OUT, HID)
    b6t = b6.reshape(-1, 1).astype(jnp.float32)
    return (w3t, b3t, w4t, b4t, w5t, b5t, w6t, b6t)


def _pick_tm(total_tokens):
    """Lane-aligned token tile: as large as reasonable (amortizes ~0.35 us/step
    pipeline overhead, keeps the MXU lane stream long) but with >= 2 grid steps
    so v7x's second TensorCore is not idle."""
    half = max(total_tokens // 2, 1)
    tm = min(8192, half)
    tm = max((tm // 128) * 128, 128)
    if total_tokens >= 1024:
        tm = max(tm, 512)      # never let the matmul lane dim drop below ~512
    return tm


def rl3df_gate_forward(x_nchw, params, *, tm=None, out_dtype=jnp.float32):
    """x_nchw: (N, C_IN, H, W) float32.  Returns (N, C_OUT, H, W) in out_dtype."""
    N, C, H, W = x_nchw.shape
    total = N * H * W

    kp = fold_params(params)
    (w3t, b3t, w4t, b4t, w5t, b5t, w6t, b6t) = kp
    hid, c_in = w3t.shape
    c_out = w6t.shape[0]
    assert c_in == C

    if tm is None:
        tm = _pick_tm(total)
    assert tm % 128 == 0, "token tile must be lane-aligned"

    # Channels-first with batch folded into the token axis: the op is purely
    # pointwise over tokens so this is exact.  Pad tokens (with zeros) to a tile
    # multiple -> unmasked lane-dense stores regardless of per-image H*W.
    x_flat = jnp.transpose(x_nchw, (1, 0, 2, 3)).reshape(C, total)
    padded = pl.cdiv(total, tm) * tm
    if padded != total:
        x_flat = jnp.pad(x_flat, ((0, 0), (0, padded - total)))
    grid = (padded // tm,)

    full2d = lambda arr: pl.BlockSpec(arr.shape, lambda t: (0, 0))

    # --- VMEM budget: real footprint, generation-aware cap ---
    weight_bytes = sum(int(a.size) * a.dtype.itemsize for a in kp)
    itemsize_in = x_flat.dtype.itemsize
    itemsize_out = jnp.dtype(out_dtype).itemsize
    footprint = (2 * tm * C * itemsize_in            # double-buffered input tiles
                 + 2 * tm * c_out * itemsize_out     # double-buffered output tiles
                 + 2 * weight_bytes                  # resident weights (x2, conservative)
                 + tm * hid * (4 * 4 + 2 * 2))       # f32 temps + bf16 matmul operands
    try:
        vmem_cap = int(pltpu.get_tpu_info().vmem_capacity_bytes)
    except Exception:
        vmem_cap = 64 << 20                          # assume the smallest (v7x)
    vmem_limit = max(footprint + (4 << 20), 32 << 20)        # floor: v5e default is 16 MiB
    vmem_limit = int(min(vmem_limit, (vmem_cap * 7) // 8, 100 << 20))

    out_flat = pl.pallas_call(
        rl3df_gate_kernel,
        out_shape=jax.ShapeDtypeStruct((c_out, padded), out_dtype),
        grid_spec=pltpu.PrefetchScalarGridSpec(
            num_scalar_prefetch=0,
            grid=grid,
            in_specs=[
                pl.BlockSpec((C, tm), lambda t: (0, t)),       # x token tile
                full2d(w3t), full2d(b3t),
                full2d(w4t), full2d(b4t),
                full2d(w5t), full2d(b5t),
                full2d(w6t), full2d(b6t),
            ],
            out_specs=pl.BlockSpec((c_out, tm), lambda t: (0, t)),
        ),
        compiler_params=pltpu.CompilerParams(
            dimension_semantics=("parallel",),
            vmem_limit_bytes=vmem_limit,
        ),
    )(x_flat, *kp)

    # Drop token padding, restore NCHW.  (Pure layout plumbing in the wrapper.)
    out = out_flat[:, :total].reshape(c_out, N, H, W).transpose(1, 0, 2, 3)
    return out


# ----------------------------------------------------------------------------
# Parameters & pure-JAX reference
# ----------------------------------------------------------------------------
def make_params(key, c_in, hid, c_out):
    ks = jax.random.split(key, 12)
    sc = 0.1
    g1 = 1.0 + sc * jax.random.normal(ks[0], (1, c_in), jnp.float32)
    b1 = sc * jax.random.normal(ks[1], (1, c_in), jnp.float32)
    g2 = 1.0 + sc * jax.random.normal(ks[2], (1, c_in), jnp.float32)
    b2 = sc * jax.random.normal(ks[3], (1, c_in), jnp.float32)
    w3 = sc * jax.random.normal(ks[4], (c_in, hid), jnp.float32)
    b3 = sc * jax.random.normal(ks[5], (1, hid), jnp.float32)
    w4 = sc * jax.random.normal(ks[6], (hid, hid), jnp.float32)
    b4 = sc * jax.random.normal(ks[7], (1, hid), jnp.float32)
    w5 = sc * jax.random.normal(ks[8], (hid, hid), jnp.float32)
    b5 = sc * jax.random.normal(ks[9], (1, hid), jnp.float32)
    w6 = sc * jax.random.normal(ks[10], (hid, c_out), jnp.float32)
    b6 = sc * jax.random.normal(ks[11], (1, c_out), jnp.float32)
    return (g1, b1, g2, b2, w3, b3, w4, b4, w5, b5, w6, b6)


def reference_forward(x_nchw, params):
    """Pure-JAX f32 reference of the original (unfolded) sequential pipeline."""
    (g1, b1, g2, b2, w3, b3, w4, b4, w5, b5, w6, b6) = params
    N, C, H, W = x_nchw.shape
    h = jnp.transpose(x_nchw, (0, 2, 3, 1)).reshape(N * H * W, C)
    h = h * g1 + b1
    h = h * g2 + b2
    h = jnp.maximum(h @ w3 + b3, 0.0)
    h = jnp.maximum(h @ w4 + b4, 0.0)
    gate = jax.nn.sigmoid(h @ w5 + b5)
    h = h * gate
    out = h @ w6 + b6
    return out.reshape(N, H, W, -1).transpose(0, 3, 1, 2)


if __name__ == "__main__":
    key = jax.random.PRNGKey(0)
    k_x, k_p = jax.random.split(key)

    # Small NCHW image batch: batch=2, channels=4, spatial=16x16 -> 512 tokens total,
    # tile = 256 tokens -> 2 parallel grid steps (both v7x TensorCores busy).
    N, C_IN, H, W = 2, 4, 16, 16
    HID, C_OUT = 32, 8

    x = jax.random.normal(k_x, (N, C_IN, H, W), jnp.float32)
    params = make_params(k_p, C_IN, HID, C_OUT)

    out = rl3df_gate_forward(x, params)
    out = jax.block_until_ready(out)

    ref = jax.block_until_ready(reference_forward(x, params))
    assert out.shape == (N, C_OUT, H, W)
    # bf16 matmul operands for stages 2-4 (gate tanh is exact) -> 1e-2 tolerance.
    assert jnp.allclose(out, ref, atol=1e-2, rtol=1e-2), "mismatch vs JAX reference"

    print("KERNEL_OK")
</pallas_src>

<mosaic_0001>
module attributes {stable_mosaic.version = 11 : i64} {
  func.func @rl3df_gate_kernel(%arg0: i32, %arg1: memref<4x256xf32, #tpu.memory_space<vmem>>, %arg2: memref<32x4xf32, #tpu.memory_space<vmem>>, %arg3: memref<32x1xf32, #tpu.memory_space<vmem>>, %arg4: memref<32x32xbf16, #tpu.memory_space<vmem>>, %arg5: memref<32x1xf32, #tpu.memory_space<vmem>>, %arg6: memref<32x32xbf16, #tpu.memory_space<vmem>>, %arg7: memref<32x1xf32, #tpu.memory_space<vmem>>, %arg8: memref<8x32xbf16, #tpu.memory_space<vmem>>, %arg9: memref<8x1xf32, #tpu.memory_space<vmem>>, %arg10: memref<8x256xf32, #tpu.memory_space<vmem>>) attributes {dimension_semantics = [#tpu.dimension_semantics<parallel>], iteration_bounds = array<i64: 2>, scalar_prefetch = 0 : i64, scratch_operands = 0 : i64, tpu.core_type = #tpu.core_type<tc>, window_params = [{transform_indices = @transform_0, window_bounds = array<i64: 4, 256>}, {pipeline_mode = #tpu.pipeline_mode<synchronous>, transform_indices = @transform_1, window_bounds = array<i64: 32, 4>}, {pipeline_mode = #tpu.pipeline_mode<synchronous>, transform_indices = @transform_2, window_bounds = array<i64: 32, 1>}, {pipeline_mode = #tpu.pipeline_mode<synchronous>, transform_indices = @transform_3, window_bounds = array<i64: 32, 32>}, {pipeline_mode = #tpu.pipeline_mode<synchronous>, transform_indices = @transform_4, window_bounds = array<i64: 32, 1>}, {pipeline_mode = #tpu.pipeline_mode<synchronous>, transform_indices = @transform_5, window_bounds = array<i64: 32, 32>}, {pipeline_mode = #tpu.pipeline_mode<synchronous>, transform_indices = @transform_6, window_bounds = array<i64: 32, 1>}, {pipeline_mode = #tpu.pipeline_mode<synchronous>, transform_indices = @transform_7, window_bounds = array<i64: 8, 32>}, {pipeline_mode = #tpu.pipeline_mode<synchronous>, transform_indices = @transform_8, window_bounds = array<i64: 8, 1>}, {transform_indices = @transform_9, window_bounds = array<i64: 8, 256>}]} {
    %c0 = arith.constant 0 : index
    %c0_0 = arith.constant 0 : index
    %0 = vector.load %arg1[%c0, %c0_0] : memref<4x256xf32, #tpu.memory_space<vmem>>, vector<4x256xf32>
    %c0_1 = arith.constant 0 : index
    %c0_2 = arith.constant 0 : index
    %1 = vector.load %arg2[%c0_1, %c0_2] : memref<32x4xf32, #tpu.memory_space<vmem>>, vector<32x4xf32>
    %cst = arith.constant dense<0.000000e+00> : vector<32x256xf32>
    %2 = tpu.matmul %1, %0, %cst {dimension_numbers = #tpu.dot_dimension_numbers<[1], [0], [0], [1], [0, 0, 1, 1], [], []>} : vector<32x4xf32>, vector<4x256xf32>, vector<32x256xf32> -> vector<32x256xf32>
    %c0_3 = arith.constant 0 : index
    %c0_4 = arith.constant 0 : index
    %3 = vector.load %arg3[%c0_3, %c0_4] : memref<32x1xf32, #tpu.memory_space<vmem>>, vector<32x1xf32>
    %4 = vector.broadcast %3 : vector<32x1xf32> to vector<32x256xf32>
    %5 = arith.addf %2, %4 : vector<32x256xf32>
    %cst_5 = arith.constant 0.000000e+00 : f32
    %6 = vector.broadcast %cst_5 : f32 to vector<32x256xf32>
    %7 = arith.maximumf %5, %6 : vector<32x256xf32>
    %c0_6 = arith.constant 0 : index
    %c0_7 = arith.constant 0 : index
    %8 = vector.load %arg4[%c0_6, %c0_7] : memref<32x32xbf16, #tpu.memory_space<vmem>>, vector<32x32xbf16>
    %9 = arith.truncf %7 : vector<32x256xf32> to vector<32x256xbf16>
    %cst_8 = arith.constant dense<0.000000e+00> : vector<32x256xf32>
    %10 = tpu.matmul %8, %9, %cst_8 {dimension_numbers = #tpu.dot_dimension_numbers<[1], [0], [0], [1], [0, 0, 1, 1], [], []>} : vector<32x32xbf16>, vector<32x256xbf16>, vector<32x256xf32> -> vector<32x256xf32>
    %c0_9 = arith.constant 0 : index
    %c0_10 = arith.constant 0 : index
    %11 = vector.load %arg5[%c0_9, %c0_10] : memref<32x1xf32, #tpu.memory_space<vmem>>, vector<32x1xf32>
    %12 = vector.broadcast %11 : vector<32x1xf32> to vector<32x256xf32>
    %13 = arith.addf %10, %12 : vector<32x256xf32>
    %cst_11 = arith.constant 0.000000e+00 : f32
    %14 = vector.broadcast %cst_11 : f32 to vector<32x256xf32>
    %15 = arith.maximumf %13, %14 : vector<32x256xf32>
    %c0_12 = arith.constant 0 : index
    %c0_13 = arith.constant 0 : index
    %16 = vector.load %arg6[%c0_12, %c0_13] : memref<32x32xbf16, #tpu.memory_space<vmem>>, vector<32x32xbf16>
    %17 = arith.truncf %15 : vector<32x256xf32> to vector<32x256xbf16>
    %cst_14 = arith.constant dense<0.000000e+00> : vector<32x256xf32>
    %18 = tpu.matmul %16, %17, %cst_14 {dimension_numbers = #tpu.dot_dimension_numbers<[1], [0], [0], [1], [0, 0, 1, 1], [], []>} : vector<32x32xbf16>, vector<32x256xbf16>, vector<32x256xf32> -> vector<32x256xf32>
    %c0_15 = arith.constant 0 : index
    %c0_16 = arith.constant 0 : index
    %19 = vector.load %arg7[%c0_15, %c0_16] : memref<32x1xf32, #tpu.memory_space<vmem>>, vector<32x1xf32>
    %20 = vector.broadcast %19 : vector<32x1xf32> to vector<32x256xf32>
    %21 = arith.addf %18, %20 : vector<32x256xf32>
    %cst_17 = arith.constant 5.000000e-01 : f32
    %22 = vector.broadcast %cst_17 : f32 to vector<32x256xf32>
    %23 = arith.mulf %22, %21 : vector<32x256xf32>
    %24 = math.tanh %23 : vector<32x256xf32>
    %cst_18 = arith.constant 1.000000e+00 : f32
    %25 = vector.broadcast %cst_18 : f32 to vector<32x256xf32>
    %26 = arith.addf %24, %25 : vector<32x256xf32>
    %cst_19 = arith.constant 5.000000e-01 : f32
    %27 = vector.broadcast %cst_19 : f32 to vector<32x256xf32>
    %28 = arith.mulf %27, %26 : vector<32x256xf32>
    %29 = arith.mulf %15, %28 : vector<32x256xf32>
    %c0_20 = arith.constant 0 : index
    %c0_21 = arith.constant 0 : index
    %30 = vector.load %arg8[%c0_20, %c0_21] : memref<8x32xbf16, #tpu.memory_space<vmem>>, vector<8x32xbf16>
    %31 = arith.truncf %29 : vector<32x256xf32> to vector<32x256xbf16>
    %cst_22 = arith.constant dense<0.000000e+00> : vector<8x256xf32>
    %32 = tpu.matmul %30, %31, %cst_22 {dimension_numbers = #tpu.dot_dimension_numbers<[1], [0], [0], [1], [0, 0, 1, 1], [], []>} : vector<8x32xbf16>, vector<32x256xbf16>, vector<8x256xf32> -> vector<8x256xf32>
    %c0_23 = arith.constant 0 : index
    %c0_24 = arith.constant 0 : index
    %33 = vector.load %arg9[%c0_23, %c0_24] : memref<8x1xf32, #tpu.memory_space<vmem>>, vector<8x1xf32>
    %34 = vector.broadcast %33 : vector<8x1xf32> to vector<8x256xf32>
    %35 = arith.addf %32, %34 : vector<8x256xf32>
    %c0_25 = arith.constant 0 : index
    %c0_26 = arith.constant 0 : index
    %36 = vector.load %arg10[%c0_25, %c0_26] : memref<8x256xf32, #tpu.memory_space<vmem>>, vector<8x256xf32>
    tpu.vector_store %arg10[%c0_25, %c0_26], %35 {strides = array<i32>} : memref<8x256xf32, #tpu.memory_space<vmem>>, vector<8x256xf32>,
    return
  }
  func.func @transform_0(%arg0: i32) -> (i32, i32) {
    %c0_i32 = arith.constant 0 : i32
    %c0_i32_0 = arith.constant 0 : i32
    return %c0_i32, %arg0 : i32, i32
  }
  func.func @transform_1(%arg0: i32) -> (i32, i32) {
    %c0_i32 = arith.constant 0 : i32
    %c0_i32_0 = arith.constant 0 : i32
    %c0_i32_1 = arith.constant 0 : i32
    return %c0_i32, %c0_i32_0 : i32, i32
  }
  func.func @transform_2(%arg0: i32) -> (i32, i32) {
    %c0_i32 = arith.constant 0 : i32
    %c0_i32_0 = arith.constant 0 : i32
    %c0_i32_1 = arith.constant 0 : i32
    return %c0_i32, %c0_i32_0 : i32, i32
  }
  func.func @transform_3(%arg0: i32) -> (i32, i32) {
    %c0_i32 = arith.constant 0 : i32
    %c0_i32_0 = arith.constant 0 : i32
    %c0_i32_1 = arith.constant 0 : i32
    return %c0_i32, %c0_i32_0 : i32, i32
  }
  func.func @transform_4(%arg0: i32) -> (i32, i32) {
    %c0_i32 = arith.constant 0 : i32
    %c0_i32_0 = arith.constant 0 : i32
    %c0_i32_1 = arith.constant 0 : i32
    return %c0_i32, %c0_i32_0 : i32, i32
  }
  func.func @transform_5(%arg0: i32) -> (i32, i32) {
    %c0_i32 = arith.constant 0 : i32
    %c0_i32_0 = arith.constant 0 : i32
    %c0_i32_1 = arith.constant 0 : i32
    return %c0_i32, %c0_i32_0 : i32, i32
  }
  func.func @transform_6(%arg0: i32) -> (i32, i32) {
    %c0_i32 = arith.constant 0 : i32
    %c0_i32_0 = arith.constant 0 : i32
    %c0_i32_1 = arith.constant 0 : i32
    return %c0_i32, %c0_i32_0 : i32, i32
  }
  func.func @transform_7(%arg0: i32) -> (i32, i32) {
    %c0_i32 = arith.constant 0 : i32
    %c0_i32_0 = arith.constant 0 : i32
    %c0_i32_1 = arith.constant 0 : i32
    return %c0_i32, %c0_i32_0 : i32, i32
  }
  func.func @transform_8(%arg0: i32) -> (i32, i32) {
    %c0_i32 = arith.constant 0 : i32
    %c0_i32_0 = arith.constant 0 : i32
    %c0_i32_1 = arith.constant 0 : i32
    return %c0_i32, %c0_i32_0 : i32, i32
  }
  func.func @transform_9(%arg0: i32) -> (i32, i32) {
    %c0_i32 = arith.constant 0 : i32
    %c0_i32_0 = arith.constant 0 : i32
    return %c0_i32, %arg0 : i32, i32
  }
}

</mosaic_0001>

<llo_original>
// kernel: tpu_custom_call.1
$region0: #{tpu_custom_call.1}
  #allocation0 [shape = 'u32[]', space=smem, size = 0x4, offset = 0x4, fixed_abs, tag = 'smem constant byte address 0x4 - core index']
  #allocation1 [shape = 'u32[144,128]{1,0:T(1,128)}', space=vmem, size = 0x12000, scoped, tag = 'internal scratch']
  %s0 = inlined_call_operand.vmem [shape: f32[4,512], index: 0, kind: input, shape index: {}]
  %s1 = inlined_call_operand.vmem [shape: f32[32,4], index: 1, kind: input, shape index: {}]
  %s2 = inlined_call_operand.vmem [shape: f32[32,1], index: 2, kind: input, shape index: {}]
  %s3 = inlined_call_operand.vmem [shape: bf16[32,32], index: 3, kind: input, shape index: {}]
  %s4 = inlined_call_operand.vmem [shape: f32[32,1], index: 4, kind: input, shape index: {}]
  %s5 = inlined_call_operand.vmem [shape: bf16[32,32], index: 5, kind: input, shape index: {}]
  %s6 = inlined_call_operand.vmem [shape: f32[32,1], index: 6, kind: input, shape index: {}]
  %s7 = inlined_call_operand.vmem [shape: bf16[8,32], index: 7, kind: input, shape index: {}]
  %s8 = inlined_call_operand.vmem [shape: f32[8,1], index: 8, kind: input, shape index: {}]
  %s9 = inlined_call_operand.hbm [shape: f32[8,512], index: 9, kind: output, shape index: {}]
  %s10 = sld [smem:[#allocation0]]
  $region69: #{tpu_custom_call.1} parent=0
    _
  %s12 = ssub.s32 1, %s10
  %s13 = scalar_select 0, %s12, %s10
  $region1: #{tpu_custom_call.1} parent=0
    #allocation2 [shape = 'u8[16384]{0}', space=vmem, size = 0x4000, scoped, tag = 'output window, operand 0']
    #allocation3 [shape = 's32[2]{0}', space=sflag, size = 0x8, scoped, tag = 'scoped memory for tpu_custom_call.1']
    %14 = vsyncpa [#allocation3], 0
    %s15 = scalar_lea.sflag [#allocation3], 1
    %16 = vsyncpa %s15, 0
    loop: start=0, step=1, limit=4
    $region2: #{tpu_custom_call.1} parent=1 // loop_pre_header
      _
    $region3: #{tpu_custom_call.1} parent=1 // loop_header
      %s18 = sphi 0, %s22
      %p19 = scmp.ge.s32.totalorder %s18, 4
      %s28 = sphi 0, %s30
      %s31 = sphi 0, %s28
      %s32 = sphi 0, %s31
      %s48 = sphi 0, %s32
      %s52 = sphi 0, %s52
      %s54 = sphi 0, %s52
      %s55 = sphi 0, %s54
      %s69 = sphi 0, %s55
      %s73 = sphi 0, %s73
      %s75 = sphi 0, %s73
      %s76 = sphi 0, %s75
      %s90 = sphi 0, %s76
      %s94 = sphi 0, %s94
      %s96 = sphi 0, %s94
      %s97 = sphi 0, %s96
      %s111 = sphi 0, %s97
      %s115 = sphi 0, %s115
      %s117 = sphi 0, %s115
      %s118 = sphi 0, %s117
      %s132 = sphi 0, %s118
      %s136 = sphi 0, %s136
      %s138 = sphi 0, %s136
      %s139 = sphi 0, %s138
      %s153 = sphi 0, %s139
      %s157 = sphi 0, %s157
      %s159 = sphi 0, %s157
      %s160 = sphi 0, %s159
      %s174 = sphi 0, %s160
      %s178 = sphi 0, %s178
      %s180 = sphi 0, %s178
      %s181 = sphi 0, %s180
      %s195 = sphi 0, %s181
      %s199 = sphi 0, %s199
      %s201 = sphi 0, %s199
      %s202 = sphi 0, %s201
      %s216 = sphi 0, %s202
      %s222 = sphi 0, %s224
      %s225 = sphi 0, %s222
      %s226 = sphi 0, %s225
      %s242 = sphi 0, %s226
    $region4: #{tpu_custom_call.1} parent=1 // loop_header_branch
      %21 = sbr.rel (%p19) target = $region8
    $region5: #{tpu_custom_call.1} parent=1 // loop_body
      %s23 = ssub.s32 %s18, 1
      %s24 = ssub.s32 %s18, 2
      %s25 = sadd.s32 %s18, 1
      %s26 = ssub.s32 %s18, %s25
      %p27 = scmp.eq.s32.totalorder %s26, 0
      %s29 = sadd.s32 %s28, 1
      %s30 = scalar_select %p27, %s28, %s29
      %p33 = pneg %p27
      %p34 = scmp.eq.s32.totalorder %s18, 1
      %p35 = por %p33, %p34
      %p36 = scmp.ne.s32.totalorder %s28, %s31
      %p37 = scmp.eq.s32.totalorder %s18, 0
      %p38 = por %p36, %p37
      %p39 = scmp.ne.s32.totalorder %s28, %s31
      %p40 = scmp.eq.s32.totalorder %s23, 1
      %p41 = por %p39, %p40
      %p42 = scmp.ne.s32.totalorder %s31, %s32
      %p43 = scmp.eq.s32.totalorder %s23, 0
      %p44 = por %p42, %p43
      %p45 = scmp.ne.s32.totalorder %s31, %s32
      %p46 = scmp.eq.s32.totalorder %s24, 1
      %p47 = por %p45, %p46
      %p49 = scmp.ne.s32.totalorder %s32, %s48
      %p50 = scmp.eq.s32.totalorder %s24, 0
      %p51 = por %p49, %p50
      %s53 = sadd.s32 %s52, 1
      %p56 = scmp.eq.s32.totalorder %s18, 1
      %p57 = scmp.ne.s32.totalorder %s52, %s54
      %p58 = scmp.eq.s32.totalorder %s18, 0
      %p59 = por %p57, %p58
      %p60 = scmp.ne.s32.totalorder %s52, %s54
      %p61 = scmp.eq.s32.totalorder %s23, 1
      %p62 = por %p60, %p61
      %p63 = scmp.ne.s32.totalorder %s54, %s55
      %p64 = scmp.eq.s32.totalorder %s23, 0
      %p65 = por %p63, %p64
      %p66 = scmp.ne.s32.totalorder %s54, %s55
      %p67 = scmp.eq.s32.totalorder %s24, 1
      %p68 = por %p66, %p67
      %p70 = scmp.ne.s32.totalorder %s55, %s69
      %p71 = scmp.eq.s32.totalorder %s24, 0
      %p72 = por %p70, %p71
      %s74 = sadd.s32 %s73, 1
      %p77 = scmp.eq.s32.totalorder %s18, 1
      %p78 = scmp.ne.s32.totalorder %s73, %s75
      %p79 = scmp.eq.s32.totalorder %s18, 0
      %p80 = por %p78, %p79
      %p81 = scmp.ne.s32.totalorder %s73, %s75
      %p82 = scmp.eq.s32.totalorder %s23, 1
      %p83 = por %p81, %p82
      %p84 = scmp.ne.s32.totalorder %s75, %s76
      %p85 = scmp.eq.s32.totalorder %s23, 0
      %p86 = por %p84, %p85
      %p87 = scmp.ne.s32.totalorder %s75, %s76
      %p88 = scmp.eq.s32.totalorder %s24, 1
      %p89 = por %p87, %p88
      %p91 = scmp.ne.s32.totalorder %s76, %s90
      %p92 = scmp.eq.s32.totalorder %s24, 0
      %p93 = por %p91, %p92
      %s95 = sadd.s32 %s94, 1
      %p98 = scmp.eq.s32.totalorder %s18, 1
      %p99 = scmp.ne.s32.totalorder %s94, %s96
      %p100 = scmp.eq.s32.totalorder %s18, 0
      %p101 = por %p99, %p100
      %p102 = scmp.ne.s32.totalorder %s94, %s96
      %p103 = scmp.eq.s32.totalorder %s23, 1
      %p104 = por %p102, %p103
      %p105 = scmp.ne.s32.totalorder %s96, %s97
      %p106 = scmp.eq.s32.totalorder %s23, 0
      %p107 = por %p105, %p106
      %p108 = scmp.ne.s32.totalorder %s96, %s97
      %p109 = scmp.eq.s32.totalorder %s24, 1
      %p110 = por %p108, %p109
      %p112 = scmp.ne.s32.totalorder %s97, %s111
      %p113 = scmp.eq.s32.totalorder %s24, 0
      %p114 = por %p112, %p113
      %s116 = sadd.s32 %s115, 1
      %p119 = scmp.eq.s32.totalorder %s18, 1
      %p120 = scmp.ne.s32.totalorder %s115, %s117
      %p121 = scmp.eq.s32.totalorder %s18, 0
      %p122 = por %p120, %p121
      %p123 = scmp.ne.s32.totalorder %s115, %s117
      %p124 = scmp.eq.s32.totalorder %s23, 1
      %p125 = por %p123, %p124
      %p126 = scmp.ne.s32.totalorder %s117, %s118
      %p127 = scmp.eq.s32.totalorder %s23, 0
      %p128 = por %p126, %p127
      %p129 = scmp.ne.s32.totalorder %s117, %s118
      %p130 = scmp.eq.s32.totalorder %s24, 1
      %p131 = por %p129, %p130
      %p133 = scmp.ne.s32.totalorder %s118, %s132
      %p134 = scmp.eq.s32.totalorder %s24, 0
      %p135 = por %p133, %p134
      %s137 = sadd.s32 %s136, 1
      %p140 = scmp.eq.s32.totalorder %s18, 1
      %p141 = scmp.ne.s32.totalorder %s136, %s138
      %p142 = scmp.eq.s32.totalorder %s18, 0
      %p143 = por %p141, %p142
      %p144 = scmp.ne.s32.totalorder %s136, %s138
      %p145 = scmp.eq.s32.totalorder %s23, 1
      %p146 = por %p144, %p145
      %p147 = scmp.ne.s32.totalorder %s138, %s139
      %p148 = scmp.eq.s32.totalorder %s23, 0
      %p149 = por %p147, %p148
      %p150 = scmp.ne.s32.totalorder %s138, %s139
      %p151 = scmp.eq.s32.totalorder %s24, 1
      %p152 = por %p150, %p151
      %p154 = scmp.ne.s32.totalorder %s139, %s153
      %p155 = scmp.eq.s32.totalorder %s24, 0
      %p156 = por %p154, %p155
      %s158 = sadd.s32 %s157, 1
      %p161 = scmp.eq.s32.totalorder %s18, 1
      %p162 = scmp.ne.s32.totalorder %s157, %s159
      %p163 = scmp.eq.s32.totalorder %s18, 0
      %p164 = por %p162, %p163
      %p165 = scmp.ne.s32.totalorder %s157, %s159
      %p166 = scmp.eq.s32.totalorder %s23, 1
      %p167 = por %p165, %p166
      %p168 = scmp.ne.s32.totalorder %s159, %s160
      %p169 = scmp.eq.s32.totalorder %s23, 0
      %p170 = por %p168, %p169
      %p171 = scmp.ne.s32.totalorder %s159, %s160
      %p172 = scmp.eq.s32.totalorder %s24, 1
      %p173 = por %p171, %p172
      %p175 = scmp.ne.s32.totalorder %s160, %s174
      %p176 = scmp.eq.s32.totalorder %s24, 0
      %p177 = por %p175, %p176
      %s179 = sadd.s32 %s178, 1
      %p182 = scmp.eq.s32.totalorder %s18, 1
      %p183 = scmp.ne.s32.totalorder %s178, %s180
      %p184 = scmp.eq.s32.totalorder %s18, 0
      %p185 = por %p183, %p184
      %p186 = scmp.ne.s32.totalorder %s178, %s180
      %p187 = scmp.eq.s32.totalorder %s23, 1
      %p188 = por %p186, %p187
      %p189 = scmp.ne.s32.totalorder %s180, %s181
      %p190 = scmp.eq.s32.totalorder %s23, 0
      %p191 = por %p189, %p190
      %p192 = scmp.ne.s32.totalorder %s180, %s181
      %p193 = scmp.eq.s32.totalorder %s24, 1
      %p194 = por %p192, %p193
      %p196 = scmp.ne.s32.totalorder %s181, %s195
      %p197 = scmp.eq.s32.totalorder %s24, 0
      %p198 = por %p196, %p197
      %s200 = sadd.s32 %s199, 1
      %p203 = scmp.eq.s32.totalorder %s18, 1
      %p204 = scmp.ne.s32.totalorder %s199, %s201
      %p205 = scmp.eq.s32.totalorder %s18, 0
      %p206 = por %p204, %p205
      %p207 = scmp.ne.s32.totalorder %s199, %s201
      %p208 = scmp.eq.s32.totalorder %s23, 1
      %p209 = por %p207, %p208
      %p210 = scmp.ne.s32.totalorder %s201, %s202
      %p211 = scmp.eq.s32.totalorder %s23, 0
      %p212 = por %p210, %p211
      %p213 = scmp.ne.s32.totalorder %s201, %s202
      %p214 = scmp.eq.s32.totalorder %s24, 1
      %p215 = por %p213, %p214
      %p217 = scmp.ne.s32.totalorder %s202, %s216
      %p218 = scmp.eq.s32.totalorder %s24, 0
      %p219 = por %p217, %p218
      %s220 = ssub.s32 %s18, %s25
      %p221 = scmp.eq.s32.totalorder %s220, 0
      %s223 = sadd.s32 %s222, 1
      %s224 = scalar_select %p221, %s222, %s223
      %p227 = pneg %p221
      %p228 = scmp.eq.s32.totalorder %s18, 1
      %p229 = por %p227, %p228
      %p230 = scmp.ne.s32.totalorder %s222, %s225
      %p231 = scmp.eq.s32.totalorder %s18, 0
      %p232 = por %p230, %p231
      %p233 = scmp.ne.s32.totalorder %s222, %s225
      %p234 = scmp.eq.s32.totalorder %s23, 1
      %p235 = por %p233, %p234
      %p236 = scmp.ne.s32.totalorder %s225, %s226
      %p237 = scmp.eq.s32.totalorder %s23, 0
      %p238 = por %p236, %p237
      %p239 = scmp.ne.s32.totalorder %s225, %s226
      %p240 = scmp.eq.s32.totalorder %s24, 1
      %p241 = por %p239, %p240
      %p243 = scmp.ne.s32.totalorder %s226, %s242
      %p244 = scmp.eq.s32.totalorder %s24, 0
      %p245 = por %p243, %p244
      %p246 = scmp.le.s32.totalorder 1, %s18
      %p247 = scmp.lt.s32.totalorder %s18, 3
      %p248 = pnand %p246, %p247
      %p249 = pneg %p248
      // Predicated region
      $region9: #{tpu_custom_call.1} parent=5 // pred_check
        _
      $region10: #{tpu_custom_call.1} parent=5 // pred_check_branch
        %251 = sbr.rel (%p248) target = $region12
      $region11: #{tpu_custom_call.1} parent=5 // pred_region
        %s252 = ssub.s32 %s18, 1
        // Predicated region
        $region13: #{tpu_custom_call.1} parent=11 // pred_check
          %p253 = pneg %p65
        $region14: #{tpu_custom_call.1} parent=11 // pred_check_branch
          %255 = sbr.rel (%p253) target = $region16
        $region15: #{tpu_custom_call.1} parent=11 // pred_region
          _
        $region16: #{tpu_custom_call.1} parent=11 // pred_fallthru
          _
        // Predicated region
        $region17: #{tpu_custom_call.1} parent=11 // pred_check
          %p256 = pneg %p86
        $region18: #{tpu_custom_call.1} parent=11 // pred_check_branch
          %258 = sbr.rel (%p256) target = $region20
        $region19: #{tpu_custom_call.1} parent=11 // pred_region
          _
        $region20: #{tpu_custom_call.1} parent=11 // pred_fallthru
          _
        // Predicated region
        $region21: #{tpu_custom_call.1} parent=11 // pred_check
          %p259 = pneg %p107
        $region22: #{tpu_custom_call.1} parent=11 // pred_check_branch
          %261 = sbr.rel (%p259) target = $region24
        $region23: #{tpu_custom_call.1} parent=11 // pred_region
          _
        $region24: #{tpu_custom_call.1} parent=11 // pred_fallthru
          _
        // Predicated region
        $region25: #{tpu_custom_call.1} parent=11 // pred_check
          %p262 = pneg %p128
        $region26: #{tpu_custom_call.1} parent=11 // pred_check_branch
          %264 = sbr.rel (%p262) target = $region28
        $region27: #{tpu_custom_call.1} parent=11 // pred_region
          _
        $region28: #{tpu_custom_call.1} parent=11 // pred_fallthru
          _
        // Predicated region
        $region29: #{tpu_custom_call.1} parent=11 // pred_check
          %p265 = pneg %p149
        $region30: #{tpu_custom_call.1} parent=11 // pred_check_branch
          %267 = sbr.rel (%p265) target = $region32
        $region31: #{tpu_custom_call.1} parent=11 // pred_region
          _
        $region32: #{tpu_custom_call.1} parent=11 // pred_fallthru
          _
        // Predicated region
        $region33: #{tpu_custom_call.1} parent=11 // pred_check
          %p268 = pneg %p170
        $region34: #{tpu_custom_call.1} parent=11 // pred_check_branch
          %270 = sbr.rel (%p268) target = $region36
        $region35: #{tpu_custom_call.1} parent=11 // pred_region
          _
        $region36: #{tpu_custom_call.1} parent=11 // pred_fallthru
          _
        // Predicated region
        $region37: #{tpu_custom_call.1} parent=11 // pred_check
          %p271 = pneg %p191
        $region38: #{tpu_custom_call.1} parent=11 // pred_check_branch
          %273 = sbr.rel (%p271) target = $region40
        $region39: #{tpu_custom_call.1} parent=11 // pred_region
          _
        $region40: #{tpu_custom_call.1} parent=11 // pred_fallthru
          _
        // Predicated region
        $region41: #{tpu_custom_call.1} parent=11 // pred_check
          %p274 = pneg %p212
        $region42: #{tpu_custom_call.1} parent=11 // pred_check_branch
          %276 = sbr.rel (%p274) target = $region44
        $region43: #{tpu_custom_call.1} parent=11 // pred_region
          _
        $region44: #{tpu_custom_call.1} parent=11 // pred_fallthru
          _
      $region12: #{tpu_custom_call.1} parent=5 // pred_fallthru
        _
      %p277 = scmp.lt.s32.totalorder %s18, 2
      // Predicated region
      $region45: #{tpu_custom_call.1} parent=5 // pred_check
        %p278 = pneg %p277
      $region46: #{tpu_custom_call.1} parent=5 // pred_check_branch
        %280 = sbr.rel (%p278) target = $region48
      $region47: #{tpu_custom_call.1} parent=5 // pred_region
        // Predicated region
        $region49: #{tpu_custom_call.1} parent=47 // pred_check
          %p281 = pneg %p38
        $region50: #{tpu_custom_call.1} parent=47 // pred_check_branch
          %283 = sbr.rel (%p281) target = $region52
        $region51: #{tpu_custom_call.1} parent=47 // pred_region
          %s284 = smul.u32 2, %s18
          %p285 = scmp.lt.s32.totalorder %s284, 3
          %s286 = scalar_select %p285, %s284, 3
          %s287 = smul.addr %s286, 4
          %s288 = scalar_lea.vmem %s0, %s287
          %s289 = smul.u32 2, %s18
        $region52: #{tpu_custom_call.1} parent=47 // pred_fallthru
          _
      $region48: #{tpu_custom_call.1} parent=5 // pred_fallthru
        _
      %p290 = scmp.le.s32.totalorder 1, %s18
      %p291 = scmp.lt.s32.totalorder %s18, 3
      %p292 = pnand %p290, %p291
      %p293 = pneg %p292
      // Predicated region
      $region53: #{tpu_custom_call.1} parent=5 // pred_check
        _
      $region54: #{tpu_custom_call.1} parent=5 // pred_check_branch
        %295 = sbr.rel (%p292) target = $region56
      $region55: #{tpu_custom_call.1} parent=5 // pred_region
        %s296 = ssub.s32 %s18, 1
        %s297 = smul.u32 2, %s23
        %p298 = scmp.lt.s32.totalorder %s297, 3
        %s299 = scalar_select %p298, %s297, 3
        %s300 = smul.addr %s299, 4
        %s301 = scalar_lea.vmem %s0, %s300
        %p302 = pneg %p44
        %p303 = pneg %p41
        %p304 = pneg %p65
        %p305 = pneg %p62
        %p306 = pneg %p86
        %p307 = pneg %p83
        %p308 = pneg %p107
        %p309 = pneg %p104
        %p310 = pneg %p128
        %p311 = pneg %p125
        %p312 = pneg %p149
        %p313 = pneg %p146
        %p314 = pneg %p170
        %p315 = pneg %p167
        %p316 = pneg %p191
        %p317 = pneg %p188
        %p318 = pneg %p212
        %p319 = pneg %p209
        %p320 = pneg %p238
        %p321 = pneg %p235
        %s322 = sand.u32 %s225, 1
        %s323 = scalar_lea.sflag [#allocation3], %s322
        %s324 = sand.u32 %s225, 1
        %s325 = smul.addr %s324, 16
        %s326 = scalar_lea.vmem [#allocation2], %s325
        %s327 = smul.u32 2, %s23
        %p328 = scmp.lt.s32.totalorder %s327, 3
        %s329 = scalar_select %p328, %s327, 3
        %s330 = smul.addr %s329, 4
        %s331 = scalar_lea.vmem %s0, %s330
        %s332 = smul.u32 2, %s23
        %s333 = smul.u32 2, %s23
        %v335 = vld [vmem:[%s331] sm:$0xff]
        %v336 = vld [vmem:[%s1] sm:$0xff]
        %v337 = vld [vmem:[%s1 + $0x8] sm:$0xff]
        %v338 = vld [vmem:[%s1 + $0x10] sm:$0xff]
        %v339 = vld [vmem:[%s1 + $0x18] sm:$0xff]
        %v340 = vld [vmem:[%s2] sm:$0xff]
        %v341 = vld [vmem:[%s2 + $0x8] sm:$0xff]
        %v342 = vld [vmem:[%s2 + $0x10] sm:$0xff]
        %v343 = vld [vmem:[%s2 + $0x18] sm:$0xff]
        %345 = vset.pattern.permute.xlu0 0
        %346 = vperm.xlu0 %345, %v340
        %v347 = vpop.permute.xlu0 %346
        %350 = vset.pattern.permute.xlu0 0
        %351 = vperm.xlu0 %350, %v341
        %v352 = vpop.permute.xlu0 %351
        %355 = vset.pattern.permute.xlu0 0
        %356 = vperm.xlu0 %355, %v342
        %v357 = vpop.permute.xlu0 %356
        %360 = vset.pattern.permute.xlu0 0
        %361 = vperm.xlu0 %360, %v343
        %v362 = vpop.permute.xlu0 %361
        %v365 = vcombine.high %v335, %v335
        %vm366 = vcmask 31744
        %v368 = vsel %vm366, %v336, 0
        %v371 = vsel %vm366, %v337, 0
        %v374 = vsel %vm366, %v338, 0
        %v377 = vsel %vm366, %v339, 0
        %vm379 = vcmask 1043456
        %v380 = vsel %vm379, %v335, 0
        %v382 = vsel %vm379, %v365, 0
        %384 = vmatprep.subr.mxu0 0.0
        %385 = vmatpush1.msra.mxu0 0.0
        %386 = vmatprep.subr.mxu0 0.0
        %387 = vmatpush1.msra.mxu0 0.0
        %388 = vmatprep.subr.mxu0 0.0
        %389 = vmatpush1.msra.mxu0 0.0
        %390 = vmatprep.subr.mxu0 0.0
        %391 = vmatpush1.msra.mxu0 0.0
        %392 = vmatprep.subr.mxu0 0.0
        %393 = vmatpush1.msra.mxu0 0.0
        %394 = vmatprep.subr.mxu0 0.0
        %395 = vmatpush1.msra.mxu0 0.0
        %396 = vmatprep.subr.mxu0 0.0
        %397 = vmatpush1.msra.mxu0 0.0
        %398 = vmatprep.subr.mxu0 0.0
        %399 = vmatpush1.msra.mxu0 0.0
        %400 = vmatprep.subr.mxu0 0.0
        %401 = vmatpush1.msra.mxu0 0.0
        %402 = vmatprep.subr.mxu0 0.0
        %403 = vmatpush1.msra.mxu0 0.0
        %404 = vmatprep.subr.mxu0 0.0
        %405 = vmatpush1.msra.mxu0 0.0
        %406 = vmatprep.subr.mxu0 0.0
        %407 = vmatpush1.msra.mxu0 0.0
        %408 = vmatprep.subr.mxu0 0.0
        %409 = vmatpush1.msra.mxu0 0.0
        %410 = vmatprep.subr.mxu0 0.0
        %411 = vmatpush1.msra.mxu0 0.0
        %412 = vmatprep.subr.mxu0 0.0
        %413 = vmatpush1.msra.mxu0 0.0
        %414 = vmatprep.subr.mxu0 %v382
        %415 = vmatpush1.msra.mxu0 %v380
        %416 = vmatprep.subr.mxu0 0.0
        %417 = vmatpush2.msra.mxu0 0.0
        %418 = vmatprep.subr.mxu0 0.0
        %419 = vmatpush2.msra.mxu0 0.0
        %420 = vmatprep.subr.mxu0 0.0
        %421 = vmatpush2.msra.mxu0 0.0
        %422 = vmatprep.subr.mxu0 0.0
        %423 = vmatpush2.msra.mxu0 0.0
        %424 = vmatprep.subr.mxu0 0.0
        %425 = vmatpush2.msra.mxu0 0.0
        %426 = vmatprep.subr.mxu0 0.0
        %427 = vmatpush2.msra.mxu0 0.0
        %428 = vmatprep.subr.mxu0 0.0
        %429 = vmatpush2.msra.mxu0 0.0
        %430 = vmatprep.subr.mxu0 0.0
        %431 = vmatpush2.msra.mxu0 0.0
        %432 = vmatprep.subr.mxu0 0.0
        %433 = vmatpush2.msra.mxu0 0.0
        %434 = vmatprep.subr.mxu0 0.0
        %435 = vmatpush2.msra.mxu0 0.0
        %436 = vmatprep.subr.mxu0 0.0
        %437 = vmatpush2.msra.mxu0 0.0
        %438 = vmatprep.subr.mxu0 0.0
        %439 = vmatpush2.msra.mxu0 0.0
        %440 = vmatprep.subr.mxu0 0.0
        %441 = vmatpush2.msra.mxu0 0.0
        %442 = vmatprep.subr.mxu0 0.0
        %443 = vmatpush2.msra.mxu0 0.0
        %444 = vmatprep.subr.mxu0 0.0
        %445 = vmatpush2.msra.mxu0 0.0
        %446 = vmatprep.subr.mxu0 0.0
        %447 = vmatpush2.msra.mxu0 0.0
        %448 = vmatprep.mubr.f32.mxu0 0.0
        %449 = vmatmul.mubr.f32.gmra.mxu0 %v368
        %v450 = vpop.f32.mrf.mxu0
        %v451 = vadd.f32 %v347, %v450
        %v452 = vpop.f32.mrf.mxu0
        %v453 = vadd.f32 %v347, %v452
        %454 = vmatprep.mubr.f32.mxu0 0.0
        %455 = vmatmul.mubr.f32.gmra.mxu0 %v371
        %v456 = vpop.f32.mrf.mxu0
        %v457 = vadd.f32 %v352, %v456
        %v458 = vpop.f32.mrf.mxu0
        %v459 = vadd.f32 %v352, %v458
        %460 = vmatprep.mubr.f32.mxu0 0.0
        %461 = vmatmul.mubr.f32.gmra.mxu0 %v374
        %v462 = vpop.f32.mrf.mxu0
        %v463 = vadd.f32 %v357, %v462
        %v464 = vpop.f32.mrf.mxu0
        %v465 = vadd.f32 %v357, %v464
        %466 = vmatprep.mubr.f32.mxu0 0.0
        %467 = vmatmul.mubr.f32.gmra.mxu0 %v377
        %v468 = vpop.f32.mrf.mxu0
        %v469 = vadd.f32 %v362, %v468
        %v470 = vpop.f32.mrf.mxu0
        %v471 = vadd.f32 %v362, %v470
        %472 = vdwg.mxu0
        %v473 = vmax.f32 %v451, 0.0
        %v474 = vmax.f32 %v453, 0.0
        %v475 = vmax.f32 %v457, 0.0
        %v476 = vmax.f32 %v459, 0.0
        %v477 = vmax.f32 %v463, 0.0
        %v478 = vmax.f32 %v465, 0.0
        %v479 = vmax.f32 %v469, 0.0
        %v480 = vmax.f32 %v471, 0.0
        %v481 = vld [vmem:[%s3] sm:$0xf]
        %v482 = vld [vmem:[%s3 + $0x4] sm:$0xf]
        %v483 = vld [vmem:[%s3 + $0x8] sm:$0xf]
        %v484 = vld [vmem:[%s3 + $0xc] sm:$0xf]
        %v485 = vpack.c.bf16 %v475, %v473
        %v486 = vpack.c.bf16 %v476, %v474
        %v487 = vpack.c.bf16 %v479, %v477
        %v488 = vpack.c.bf16 %v480, %v478
        %v489 = vld [vmem:[%s4] sm:$0xff]
        %v490 = vld [vmem:[%s4 + $0x8] sm:$0xff]
        %v491 = vld [vmem:[%s4 + $0x10] sm:$0xff]
        %v492 = vld [vmem:[%s4 + $0x18] sm:$0xff]
        %494 = vset.pattern.permute.xlu0 0
        %495 = vperm.xlu0 %494, %v489
        %v496 = vpop.permute.xlu0 %495
        %499 = vset.pattern.permute.xlu0 0
        %500 = vperm.xlu0 %499, %v490
        %v501 = vpop.permute.xlu0 %500
        %504 = vset.pattern.permute.xlu0 0
        %505 = vperm.xlu0 %504, %v491
        %v506 = vpop.permute.xlu0 %505
        %509 = vset.pattern.permute.xlu0 0
        %510 = vperm.xlu0 %509, %v492
        %v511 = vpop.permute.xlu0 %510
        %v517 = vunpack.c.l.b16 %v481
        %v518 = vunpack.c.l.b16 %v482
        %v519 = vunpack.c.l.b16 %v483
        %v520 = vunpack.c.l.b16 %v484
        %v521 = vpack.c.b16 %v518, %v517
        %v522 = vpack.c.b16 %v520, %v519
        %vm523 = vcmask 261120
        %v525 = vsel %vm523, %v521, 0
        %v528 = vsel %vm523, %v522, 0
        %530 = vmatprep.subr.bf16.mxu0 0
        %531 = vmatpush1.bf16.msra.mxu0 0
        %532 = vmatprep.subr.bf16.mxu0 0
        %533 = vmatpush1.bf16.msra.mxu0 0
        %534 = vmatprep.subr.bf16.mxu0 0
        %535 = vmatpush1.bf16.msra.mxu0 0
        %536 = vmatprep.subr.bf16.mxu0 0
        %537 = vmatpush1.bf16.msra.mxu0 0
        %538 = vmatprep.subr.bf16.mxu0 0
        %539 = vmatpush1.bf16.msra.mxu0 0
        %540 = vmatprep.subr.bf16.mxu0 0
        %541 = vmatpush1.bf16.msra.mxu0 0
        %542 = vmatprep.subr.bf16.mxu0 %v488
        %543 = vmatpush1.bf16.msra.mxu0 %v487
        %544 = vmatprep.subr.bf16.mxu0 %v486
        %545 = vmatpush1.bf16.msra.mxu0 %v485
        %546 = vmatprep.subr.bf16.mxu0 0
        %547 = vmatpush2.bf16.msra.mxu0 0
        %548 = vmatprep.subr.bf16.mxu0 0
        %549 = vmatpush2.bf16.msra.mxu0 0
        %550 = vmatprep.subr.bf16.mxu0 0
        %551 = vmatpush2.bf16.msra.mxu0 0
        %552 = vmatprep.subr.bf16.mxu0 0
        %553 = vmatpush2.bf16.msra.mxu0 0
        %554 = vmatprep.subr.bf16.mxu0 0
        %555 = vmatpush2.bf16.msra.mxu0 0
        %556 = vmatprep.subr.bf16.mxu0 0
        %557 = vmatpush2.bf16.msra.mxu0 0
        %558 = vmatprep.subr.bf16.mxu0 0
        %559 = vmatpush2.bf16.msra.mxu0 0
        %560 = vmatprep.subr.bf16.mxu0 0
        %561 = vmatpush2.bf16.msra.mxu0 0
        %562 = vmatprep.mubr.bf16.mxu0 0
        %563 = vmatmul.mubr.bf16.gmra.mxu0 %v525
        %v564 = vpop.f32.mrf.mxu0
        %v565 = vadd.f32 %v496, %v564
        %v566 = vpop.f32.mrf.mxu0
        %v567 = vadd.f32 %v496, %v566
        %v568 = vpop.f32.mrf.mxu0
        %v569 = vadd.f32 %v501, %v568
        %v570 = vpop.f32.mrf.mxu0
        %v571 = vadd.f32 %v501, %v570
        %572 = vmatprep.mubr.bf16.mxu0 0
        %573 = vmatmul.mubr.bf16.gmra.mxu0 %v528
        %v574 = vpop.f32.mrf.mxu0
        %v575 = vadd.f32 %v506, %v574
        %v576 = vpop.f32.mrf.mxu0
        %v577 = vadd.f32 %v506, %v576
        %v578 = vpop.f32.mrf.mxu0
        %v579 = vadd.f32 %v511, %v578
        %v580 = vpop.f32.mrf.mxu0
        %v581 = vadd.f32 %v511, %v580
        %582 = vdwg.mxu0
        %v583 = vmax.f32 %v565, 0.0
        %v584 = vmax.f32 %v567, 0.0
        %v585 = vmax.f32 %v569, 0.0
        %v586 = vmax.f32 %v571, 0.0
        %v587 = vmax.f32 %v575, 0.0
        %v588 = vmax.f32 %v577, 0.0
        %v589 = vmax.f32 %v579, 0.0
        %v590 = vmax.f32 %v581, 0.0
        %v591 = vld [vmem:[%s5] sm:$0xf]
        %v592 = vld [vmem:[%s5 + $0x4] sm:$0xf]
        %v593 = vld [vmem:[%s5 + $0x8] sm:$0xf]
        %v594 = vld [vmem:[%s5 + $0xc] sm:$0xf]
        %v595 = vpack.c.bf16 %v585, %v583
        %v596 = vpack.c.bf16 %v586, %v584
        %v597 = vpack.c.bf16 %v589, %v587
        %v598 = vpack.c.bf16 %v590, %v588
        %v599 = vld [vmem:[%s6] sm:$0xff]
        %v600 = vld [vmem:[%s6 + $0x8] sm:$0xff]
        %v601 = vld [vmem:[%s6 + $0x10] sm:$0xff]
        %v602 = vld [vmem:[%s6 + $0x18] sm:$0xff]
        %604 = vset.pattern.permute.xlu0 0
        %605 = vperm.xlu0 %604, %v599
        %v606 = vpop.permute.xlu0 %605
        %609 = vset.pattern.permute.xlu0 0
        %610 = vperm.xlu0 %609, %v600
        %v611 = vpop.permute.xlu0 %610
        %614 = vset.pattern.permute.xlu0 0
        %615 = vperm.xlu0 %614, %v601
        %v616 = vpop.permute.xlu0 %615
        %619 = vset.pattern.permute.xlu0 0
        %620 = vperm.xlu0 %619, %v602
        %v621 = vpop.permute.xlu0 %620
        %v627 = vunpack.c.l.b16 %v591
        %v628 = vunpack.c.l.b16 %v592
        %v629 = vunpack.c.l.b16 %v593
        %v630 = vunpack.c.l.b16 %v594
        %v631 = vpack.c.b16 %v628, %v627
        %v632 = vpack.c.b16 %v630, %v629
        %v634 = vsel %vm523, %v631, 0
        %v637 = vsel %vm523, %v632, 0
        %639 = vmatprep.subr.bf16.mxu0 0
        %640 = vmatpush1.bf16.msra.mxu0 0
        %641 = vmatprep.subr.bf16.mxu0 0
        %642 = vmatpush1.bf16.msra.mxu0 0
        %643 = vmatprep.subr.bf16.mxu0 0
        %644 = vmatpush1.bf16.msra.mxu0 0
        %645 = vmatprep.subr.bf16.mxu0 0
        %646 = vmatpush1.bf16.msra.mxu0 0
        %647 = vmatprep.subr.bf16.mxu0 0
        %648 = vmatpush1.bf16.msra.mxu0 0
        %649 = vmatprep.subr.bf16.mxu0 0
        %650 = vmatpush1.bf16.msra.mxu0 0
        %651 = vmatprep.subr.bf16.mxu0 %v598
        %652 = vmatpush1.bf16.msra.mxu0 %v597
        %653 = vmatprep.subr.bf16.mxu0 %v596
        %654 = vmatpush1.bf16.msra.mxu0 %v595
        %655 = vmatprep.subr.bf16.mxu0 0
        %656 = vmatpush2.bf16.msra.mxu0 0
        %657 = vmatprep.subr.bf16.mxu0 0
        %658 = vmatpush2.bf16.msra.mxu0 0
        %659 = vmatprep.subr.bf16.mxu0 0
        %660 = vmatpush2.bf16.msra.mxu0 0
        %661 = vmatprep.subr.bf16.mxu0 0
        %662 = vmatpush2.bf16.msra.mxu0 0
        %663 = vmatprep.subr.bf16.mxu0 0
        %664 = vmatpush2.bf16.msra.mxu0 0
        %665 = vmatprep.subr.bf16.mxu0 0
        %666 = vmatpush2.bf16.msra.mxu0 0
        %667 = vmatprep.subr.bf16.mxu0 0
        %668 = vmatpush2.bf16.msra.mxu0 0
        %669 = vmatprep.subr.bf16.mxu0 0
        %670 = vmatpush2.bf16.msra.mxu0 0
        %671 = vmatprep.mubr.bf16.mxu0 0
        %672 = vmatmul.mubr.bf16.gmra.mxu0 %v634
        %v673 = vpop.f32.mrf.mxu0
        %v674 = vadd.f32 %v606, %v673
        %v675 = vpop.f32.mrf.mxu0
        %v676 = vadd.f32 %v606, %v675
        %v677 = vpop.f32.mrf.mxu0
        %v678 = vadd.f32 %v611, %v677
        %v679 = vpop.f32.mrf.mxu0
        %v680 = vadd.f32 %v611, %v679
        %681 = vmatprep.mubr.bf16.mxu0 0
        %682 = vmatmul.mubr.bf16.gmra.mxu0 %v637
        %v683 = vpop.f32.mrf.mxu0
        %v684 = vadd.f32 %v616, %v683
        %v685 = vpop.f32.mrf.mxu0
        %v686 = vadd.f32 %v616, %v685
        %v687 = vpop.f32.mrf.mxu0
        %v688 = vadd.f32 %v621, %v687
        %v689 = vpop.f32.mrf.mxu0
        %v690 = vadd.f32 %v621, %v689
        %691 = vdwg.mxu0
        %v692 = vmul.f32 %v674, 0.5
        %v693 = vmul.f32 %v676, 0.5
        %v694 = vmul.f32 %v678, 0.5
        %v695 = vmul.f32 %v680, 0.5
        %v696 = vmul.f32 %v684, 0.5
        %v697 = vmul.f32 %v686, 0.5
        %v698 = vmul.f32 %v688, 0.5
        %v699 = vmul.f32 %v690, 0.5
        %v700 = vtanh.pop %v692
        %v701 = vtanh.pop %v693
        %v702 = vtanh.pop %v694
        %v703 = vtanh.pop %v695
        %v704 = vtanh.pop %v696
        %v705 = vtanh.pop %v697
        %v706 = vtanh.pop %v698
        %v707 = vtanh.pop %v699
        %v708 = vadd.f32 %v700, 1.0
        %v709 = vadd.f32 %v701, 1.0
        %v710 = vadd.f32 %v702, 1.0
        %v711 = vadd.f32 %v703, 1.0
        %v712 = vadd.f32 %v704, 1.0
        %v713 = vadd.f32 %v705, 1.0
        %v714 = vadd.f32 %v706, 1.0
        %v715 = vadd.f32 %v707, 1.0
        %v716 = vmul.f32 %v708, 0.5
        %v717 = vmul.f32 %v709, 0.5
        %v718 = vmul.f32 %v710, 0.5
        %v719 = vmul.f32 %v711, 0.5
        %v720 = vmul.f32 %v712, 0.5
        %v721 = vmul.f32 %v713, 0.5
        %v722 = vmul.f32 %v714, 0.5
        %v723 = vmul.f32 %v715, 0.5
        %v724 = vmul.f32 %v583, %v716
        %v725 = vmul.f32 %v584, %v717
        %v726 = vmul.f32 %v585, %v718
        %v727 = vmul.f32 %v586, %v719
        %v728 = vmul.f32 %v587, %v720
        %v729 = vmul.f32 %v588, %v721
        %v730 = vmul.f32 %v589, %v722
        %v731 = vmul.f32 %v590, %v723
        %v732 = vld [vmem:[%s7] sm:$0xf]
        %v733 = vpack.c.bf16 %v726, %v724
        %v734 = vpack.c.bf16 %v727, %v725
        %v735 = vpack.c.bf16 %v730, %v728
        %v736 = vpack.c.bf16 %v731, %v729
        %v737 = vld [vmem:[%s8] sm:$0xff]
        %739 = vset.pattern.permute.xlu0 0
        %740 = vperm.xlu0 %739, %v737
        %v741 = vpop.permute.xlu0 %740
        %v744 = vsel %vm523, %v732, 0
        %746 = vmatprep.subr.bf16.mxu0 0
        %747 = vmatpush1.bf16.msra.mxu0 0
        %748 = vmatprep.subr.bf16.mxu0 0
        %749 = vmatpush1.bf16.msra.mxu0 0
        %750 = vmatprep.subr.bf16.mxu0 0
        %751 = vmatpush1.bf16.msra.mxu0 0
        %752 = vmatprep.subr.bf16.mxu0 0
        %753 = vmatpush1.bf16.msra.mxu0 0
        %754 = vmatprep.subr.bf16.mxu0 0
        %755 = vmatpush1.bf16.msra.mxu0 0
        %756 = vmatprep.subr.bf16.mxu0 0
        %757 = vmatpush1.bf16.msra.mxu0 0
        %758 = vmatprep.subr.bf16.mxu0 %v736
        %759 = vmatpush1.bf16.msra.mxu0 %v735
        %760 = vmatprep.subr.bf16.mxu0 %v734
        %761 = vmatpush1.bf16.msra.mxu0 %v733
        %762 = vmatprep.subr.bf16.mxu0 0
        %763 = vmatpush2.bf16.msra.mxu0 0
        %764 = vmatprep.subr.bf16.mxu0 0
        %765 = vmatpush2.bf16.msra.mxu0 0
        %766 = vmatprep.subr.bf16.mxu0 0
        %767 = vmatpush2.bf16.msra.mxu0 0
        %768 = vmatprep.subr.bf16.mxu0 0
        %769 = vmatpush2.bf16.msra.mxu0 0
        %770 = vmatprep.subr.bf16.mxu0 0
        %771 = vmatpush2.bf16.msra.mxu0 0
        %772 = vmatprep.subr.bf16.mxu0 0
        %773 = vmatpush2.bf16.msra.mxu0 0
        %774 = vmatprep.subr.bf16.mxu0 0
        %775 = vmatpush2.bf16.msra.mxu0 0
        %776 = vmatprep.subr.bf16.mxu0 0
        %777 = vmatpush2.bf16.msra.mxu0 0
        %778 = vmatprep.mubr.bf16.mxu0 0
        %779 = vmatmul.mubr.bf16.gmra.mxu0 %v744
        %v780 = vpop.f32.mrf.mxu0
        %v781 = vadd.f32 %v741, %v780
        %v782 = vpop.f32.mrf.mxu0
        %v783 = vadd.f32 %v741, %v782
        %v784 = vpop.f32.mrf.mxu0
        %v785 = vpop.f32.mrf.mxu0
        %786 = vdwg.mxu0
        %787 = vst [vmem:[%s326] sm:$0xff] %v781
        %788 = vst [vmem:[%s326 + $0x8] sm:$0xff] %v783
        %s789 = sand.u32 %s225, 1
        %s790 = scalar_lea.sflag [#allocation3], %s789
        %s791 = sand.u32 %s225, 1
        %s792 = smul.addr %s791, 16
        %s793 = scalar_lea.vmem [#allocation2], %s792
        // Predicated region
        $region57: #{tpu_custom_call.1} parent=55 // pred_check
          %p794 = pneg %p235
        $region58: #{tpu_custom_call.1} parent=55 // pred_check_branch
          %796 = sbr.rel (%p794) target = $region60
        $region59: #{tpu_custom_call.1} parent=55 // pred_region
          %s797 = smul.u32 2, %s23
          %s799 = ssub.s32 256, 256
          %800 = vsyncadd %s790, %s799
          %s801 = smul.addr %s797, 128
          %s802 = scalar_lea.hbm %s9, %s801
          %s804 = sshll.u32 %s793, 4
          %s805 = int_to_ptr.vmem [resolvable:$true] %s804
          %807 = dma.vmem_to_hbm [thread:$0]  %s805, 256, %s802, %s790
        $region60: #{tpu_custom_call.1} parent=55 // pred_fallthru
          _
      $region56: #{tpu_custom_call.1} parent=5 // pred_fallthru
        _
      %p808 = scmp.le.s32.totalorder 2, %s18
      // Predicated region
      $region61: #{tpu_custom_call.1} parent=5 // pred_check
        %p809 = pneg %p808
      $region62: #{tpu_custom_call.1} parent=5 // pred_check_branch
        %811 = sbr.rel (%p809) target = $region64
      $region63: #{tpu_custom_call.1} parent=5 // pred_region
        %s812 = ssub.s32 %s18, 2
        // Predicated region
        $region65: #{tpu_custom_call.1} parent=63 // pred_check
          %p813 = pneg %p241
        $region66: #{tpu_custom_call.1} parent=63 // pred_check_branch
          %815 = sbr.rel (%p813) target = $region68
        $region67: #{tpu_custom_call.1} parent=63 // pred_region
          %s816 = sand.u32 %s226, 1
          %s817 = scalar_lea.sflag [#allocation3], %s816
          %s818 = sand.u32 %s226, 1
          %s819 = smul.addr %s818, 16
          %s820 = scalar_lea.vmem [#allocation2], %s819
          %821 = dma.done %s817, 256
        $region68: #{tpu_custom_call.1} parent=63 // pred_fallthru
          _
      $region64: #{tpu_custom_call.1} parent=5 // pred_fallthru
        _
    $region6: #{tpu_custom_call.1} parent=1 // loop_footer
      %s22 = sadd.s32 1, %s18
    $region7: #{tpu_custom_call.1} parent=1 // loop_footer_branch
      %17 = sbr.rel target = $region3
    $region8: #{tpu_custom_call.1} parent=1 // loop_exit
      _
    %822 = vsyncpa [#allocation3], 1
    %s823 = scalar_lea.sflag [#allocation3], 1
    %824 = vsyncpa %s823, 1

</llo_original>
